<compile_context>
chip_gen: v6e
topology: v6e:2x2x1
jax: 0.10.0
libtpu: 0.0.40
codegen_flags: <defaults>
</compile_context>

<pallas_src>
import functools
import math

import jax
import jax.numpy as jnp
from jax.experimental import pallas as pl
from jax.experimental.pallas import tpu as pltpu


def _focus_attention_kernel(key_ref, q_ref, out_ref, m_sc, l_sc, acc_sc,
                            *, t_total, t_tile):
    """One (batch-tile, T-tile) grid step.

    key_ref : (TB, TT, H)  chunk of keys (value == key)
    q_ref   : (1, H)       query with kp_w and 1/sqrt(H) already folded in
    out_ref : (TB, H)      context rows (written on the last T step)
    m_sc    : (TB, 1) f32  running softmax max
    l_sc    : (TB, 1) f32  running softmax denominator
    acc_sc  : (TB, H) f32  running un-normalized context
    """
    kt = pl.program_id(1)
    nt = pl.num_programs(1)

    @pl.when(kt == 0)
    def _init():
        m_sc[...] = jnp.full(m_sc.shape, -jnp.inf, dtype=m_sc.dtype)
        l_sc[...] = jnp.zeros(l_sc.shape, dtype=l_sc.dtype)
        acc_sc[...] = jnp.zeros(acc_sc.shape, dtype=acc_sc.dtype)

    # All math in f32 (bf16 keys are up-converted in-register: required on
    # v5e's VPU, free elsewhere).
    key = key_ref[...].astype(jnp.float32)               # (TB, TT, H)
    qp = q_ref[...].astype(jnp.float32)                  # (1, H) -> broadcasts

    # Static branch: only emitted when the last T chunk is ragged.
    masked = (t_total % t_tile) != 0
    if masked:
        pos = kt * t_tile + jax.lax.broadcasted_iota(jnp.int32, (1, t_tile), 1)
        valid = pos < t_total                             # (1, TT)
        # Zero the OOB tail so garbage can never poison the accumulator
        # (0 * NaN = NaN); its scores are forced to -inf below.
        key = jnp.where(valid[:, :, None], key, 0.0)

    # scores[b, t] = sum_h key[b, t, h] * q_proj[h]   (chunk-bounded VPU work;
    # the kernel is HBM-bound so VPU/XLU have slack).
    s = jnp.sum(key * qp, axis=-1)                        # (TB, TT)
    if masked:
        s = jnp.where(valid, s, -jnp.inf)

    # Online (streaming) softmax update.
    m_prev = m_sc[...]
    m_new = jnp.maximum(m_prev, jnp.max(s, axis=-1, keepdims=True))  # (TB, 1)
    alpha = jnp.exp(m_prev - m_new)                                  # (TB, 1)
    p = jnp.exp(s - m_new)                                           # (TB, TT)
    l_sc[...] = alpha * l_sc[...] + jnp.sum(p, axis=-1, keepdims=True)
    acc_sc[...] = alpha * acc_sc[...] + jnp.sum(p[:, :, None] * key, axis=1)
    m_sc[...] = m_new

    @pl.when(kt == nt - 1)
    def _finalize():
        # Normalize once at the end with an exact divide (NOT the approximate
        # EUP reciprocal -- that was the ~2e-3 correctness bug).
        out_ref[...] = (acc_sc[...] / l_sc[...]).astype(out_ref.dtype)


def _choose_tiles(B, T, H, itemsize):
    """Pick (TB, TT).

    Constraints ((8,128) rule on the last two block dims):
      * out block (TB, H):      TB % 8 == 0 or TB == B
      * key block (TB, TT, H):  TT % 8 == 0 or TT == T   (H always full)
    Targets:
      * key block <= ~2 MiB so double-buffering fits every generation
        (v5e 16 MiB scoped default ... v7x 64 MiB physical),
      * >= ~8 batch grid steps when B allows it (DMA/compute overlap + both
        v7x TensorCores), otherwise the largest tile that fits.
    """
    budget = 2 * 1024 * 1024          # bytes per key block (x2 double-buffer)

    if B <= 8:
        tb = B
    else:
        tb = 8
        while (tb < 128
               and -(-B // (2 * tb)) >= 8
               and (2 * tb) * min(T, 8) * H * itemsize <= budget):
            tb *= 2

    row_bytes = tb * H * itemsize
    tt_cap = max(8, (budget // row_bytes) // 8 * 8)
    tt = T if T <= tt_cap else tt_cap
    return tb, tt


def _effective_query(params, H, using_over_param):
    """query, optionally gated by Overparam (shared by kernel wrapper & ref)."""
    query = params["query"]
    if using_over_param:
        lin = jnp.dot(query, params["op_w"].T, precision="highest") + params["op_b"]
        c, f = lin[:, :H], lin[:, H:]
        query = jax.nn.sigmoid(f) * jnp.tanh(c)
    return query


def focus_attention(key, params, *, using_over_param=False, tiles=None):
    """key: (B, T, H). Returns context: (B, H) in key's dtype.

    `tiles=(TB, TT)` overrides the automatic tile choice (testing knob; must
    respect TB % 8 == 0 or TB == B, and TT % 8 == 0 or TT == T).
    """
    B, T, H = key.shape
    query = _effective_query(params, H, using_over_param)

    # Algebraic hoist of the key projection (exact: q . kp_b is constant over
    # T and cancels in the softmax):
    #   softmax(q @ (key@W^T + b)^T / sqrt(H)) == softmax((q@W) @ key^T / sqrt(H))
    q_proj = jnp.dot(query, params["kp_w"], precision="highest",
                     preferred_element_type=jnp.float32) / math.sqrt(H)   # (1, H)

    itemsize = key.dtype.itemsize
    tb, tt = tiles if tiles is not None else _choose_tiles(B, T, H, itemsize)
    nb, nt = pl.cdiv(B, tb), pl.cdiv(T, tt)

    kernel = functools.partial(_focus_attention_kernel, t_total=T, t_tile=tt)

    return pl.pallas_call(
        kernel,
        out_shape=jax.ShapeDtypeStruct((B, H), key.dtype),
        grid_spec=pltpu.PrefetchScalarGridSpec(
            num_scalar_prefetch=0,
            grid=(nb, nt),                                        # reduction axis last
            in_specs=[
                pl.BlockSpec((tb, tt, H), lambda b, k: (b, k, 0)),  # key chunk
                pl.BlockSpec((1, H), lambda b, k: (0, 0)),          # folded query
            ],
            out_specs=pl.BlockSpec((tb, H), lambda b, k: (b, 0)),   # resident over k
            scratch_shapes=[
                pltpu.VMEM((tb, 1), jnp.float32),   # running max
                pltpu.VMEM((tb, 1), jnp.float32),   # running denominator
                pltpu.VMEM((tb, H), jnp.float32),   # un-normalized context
            ],
        ),
        compiler_params=pltpu.CompilerParams(
            dimension_semantics=("parallel", "arbitrary"),
            vmem_limit_bytes=32 * 1024 * 1024,
        ),
        cost_estimate=pl.CostEstimate(
            flops=4 * B * T * H,
            transcendentals=B * T,
            bytes_accessed=B * T * H * itemsize + B * H * itemsize + H * 4,
        ),
    )(key, q_proj)


def focus_attention_ref(key, params, *, using_over_param=False):
    """Pure-JAX reference mirroring the PyTorch forward (keeps the bias term)."""
    B, T, H = key.shape
    query = _effective_query(params, H, using_over_param)
    kf = jnp.einsum("bth,oh->bto", key, params["kp_w"],
                    precision="highest") + params["kp_b"]            # (B, T, H)
    att = jnp.einsum("qh,bth->bt", query, kf,
                     precision="highest") / math.sqrt(H)             # (B, T)
    att = jax.nn.softmax(att, axis=1)
    return jnp.einsum("bt,bth->bh", att, key, precision="highest")   # (B, H)


def init_params(rng, H):
    # Deterministic synthetic init (module shapes; values are not a checkpoint).
    # NOTE: PyTorch inits self.query to zeros; small random values are used so
    # the attention distribution is non-trivial for testing.
    k1, k2, k3, k4, k5 = jax.random.split(rng, 5)
    return {
        "query": 0.1 * jax.random.normal(k1, (1, H), jnp.float32),
        "kp_w": 0.1 * jax.random.normal(k2, (H, H), jnp.float32),       # Linear(H, H) weight
        "kp_b": 0.1 * jax.random.normal(k3, (H,), jnp.float32),
        "op_w": 0.1 * jax.random.normal(k4, (2 * H, H), jnp.float32),   # Overparam l1 weight
        "op_b": 0.1 * jax.random.normal(k5, (2 * H,), jnp.float32),
    }


if __name__ == "__main__":
    rng = jax.random.PRNGKey(0)
    k_in, k_in2, k_par = jax.random.split(rng, 3)

    H = 32
    params = init_params(k_par, H)

    cases = [
        # (key tensor, tile override) -- the second case forces a multi-block,
        # ragged (batch and T) grid so the online-softmax / masking paths run.
        (jax.random.normal(k_in, (2, 8, H), jnp.float32), None),
        (jax.random.normal(k_in2, (20, 52, H), jnp.float32), (8, 16)),
    ]
    for key, tiles in cases:
        for uop in (False, True):
            out = jax.block_until_ready(
                focus_attention(key, params, using_over_param=uop, tiles=tiles))
            ref = focus_attention_ref(key, params, using_over_param=uop)
            assert out.shape == (key.shape[0], H)
            # Exact f32 math everywhere (no approx reciprocal) -> tight check.
            assert jnp.allclose(out, ref, atol=1e-4, rtol=1e-4), (
                key.shape, uop, float(jnp.max(jnp.abs(out - ref))))
    print("KERNEL_OK")
</pallas_src>

<mosaic_0001>
module attributes {stable_mosaic.version = 11 : i64} {
  func.func @_focus_attention_kernel(%arg0: i32, %arg1: i32, %arg2: memref<2x8x32xf32, #tpu.memory_space<vmem>>, %arg3: memref<1x32xf32, #tpu.memory_space<vmem>>, %arg4: memref<2x32xf32, #tpu.memory_space<vmem>>, %arg5: memref<2x1xf32, #tpu.memory_space<vmem>>, %arg6: memref<2x1xf32, #tpu.memory_space<vmem>>, %arg7: memref<2x32xf32, #tpu.memory_space<vmem>>) attributes {dimension_semantics = [#tpu.dimension_semantics<parallel>, #tpu.dimension_semantics<arbitrary>], iteration_bounds = array<i64: 1, 1>, scalar_prefetch = 0 : i64, scratch_operands = 3 : i64, tpu.core_type = #tpu.core_type<tc>, window_params = [{transform_indices = @transform_0, window_bounds = array<i64: 2, 8, 32>}, {pipeline_mode = #tpu.pipeline_mode<synchronous>, transform_indices = @transform_1, window_bounds = array<i64: 1, 32>}, {transform_indices = @transform_2, window_bounds = array<i64: 2, 32>}]} {
    %c0_i32 = arith.constant 0 : i32
    %0 = arith.cmpi eq, %arg1, %c0_i32 : i32
    %1 = arith.extui %0 : i1 to i32
    %c0_i32_0 = arith.constant 0 : i32
    %2 = arith.cmpi ne, %1, %c0_i32_0 : i32
    scf.if %2 {
      %cst_22 = arith.constant 0xFF800000 : f32
      %37 = vector.broadcast %cst_22 : f32 to vector<2x1xf32>
      %c0_23 = arith.constant 0 : index
      %c0_24 = arith.constant 0 : index
      %38 = vector.load %arg5[%c0_23, %c0_24] : memref<2x1xf32, #tpu.memory_space<vmem>>, vector<2x1xf32>
      tpu.vector_store %arg5[%c0_23, %c0_24], %37 {strides = array<i32>} : memref<2x1xf32, #tpu.memory_space<vmem>>, vector<2x1xf32>,
      %cst_25 = arith.constant 0.000000e+00 : f32
      %39 = vector.broadcast %cst_25 : f32 to vector<2x1xf32>
      %c0_26 = arith.constant 0 : index
      %c0_27 = arith.constant 0 : index
      %40 = vector.load %arg6[%c0_26, %c0_27] : memref<2x1xf32, #tpu.memory_space<vmem>>, vector<2x1xf32>
      tpu.vector_store %arg6[%c0_26, %c0_27], %39 {strides = array<i32>} : memref<2x1xf32, #tpu.memory_space<vmem>>, vector<2x1xf32>,
      %cst_28 = arith.constant 0.000000e+00 : f32
      %41 = vector.broadcast %cst_28 : f32 to vector<2x32xf32>
      %c0_29 = arith.constant 0 : index
      %c0_30 = arith.constant 0 : index
      %42 = vector.load %arg7[%c0_29, %c0_30] : memref<2x32xf32, #tpu.memory_space<vmem>>, vector<2x32xf32>
      tpu.vector_store %arg7[%c0_29, %c0_30], %41 {strides = array<i32>} : memref<2x32xf32, #tpu.memory_space<vmem>>, vector<2x32xf32>,
    } else {
    }
    %c0 = arith.constant 0 : index
    %c0_1 = arith.constant 0 : index
    %c0_2 = arith.constant 0 : index
    %3 = vector.load %arg2[%c0, %c0_1, %c0_2] : memref<2x8x32xf32, #tpu.memory_space<vmem>>, vector<2x8x32xf32>
    %c0_3 = arith.constant 0 : index
    %c0_4 = arith.constant 0 : index
    %4 = vector.load %arg3[%c0_3, %c0_4] : memref<1x32xf32, #tpu.memory_space<vmem>>, vector<1x32xf32>
    %5 = vector.shape_cast %4 : vector<1x32xf32> to vector<1x1x32xf32>
    %6 = vector.broadcast %5 : vector<1x1x32xf32> to vector<2x8x32xf32>
    %7 = arith.mulf %3, %6 : vector<2x8x32xf32>
    %cst = arith.constant dense<0.000000e+00> : vector<2x8xf32>
    %8 = vector.multi_reduction <add>, %7, %cst [2] : vector<2x8x32xf32> to vector<2x8xf32>
    %c0_5 = arith.constant 0 : index
    %c0_6 = arith.constant 0 : index
    %9 = vector.load %arg5[%c0_5, %c0_6] : memref<2x1xf32, #tpu.memory_space<vmem>>, vector<2x1xf32>
    %cst_7 = arith.constant dense<0xFF800000> : vector<2xf32>
    %10 = vector.multi_reduction <maximumf>, %8, %cst_7 [1] : vector<2x8xf32> to vector<2xf32>
    %11 = vector.shape_cast %10 : vector<2xf32> to vector<2x1xf32>
    %12 = arith.maximumf %9, %11 : vector<2x1xf32>
    %13 = arith.subf %9, %12 : vector<2x1xf32>
    %14 = math.exp %13 : vector<2x1xf32>
    %15 = vector.broadcast %12 : vector<2x1xf32> to vector<2x8xf32>
    %16 = arith.subf %8, %15 : vector<2x8xf32>
    %17 = math.exp %16 : vector<2x8xf32>
    %c0_8 = arith.constant 0 : index
    %c0_9 = arith.constant 0 : index
    %18 = vector.load %arg6[%c0_8, %c0_9] : memref<2x1xf32, #tpu.memory_space<vmem>>, vector<2x1xf32>
    %19 = arith.mulf %14, %18 : vector<2x1xf32>
    %cst_10 = arith.constant dense<0.000000e+00> : vector<2xf32>
    %20 = vector.multi_reduction <add>, %17, %cst_10 [1] : vector<2x8xf32> to vector<2xf32>
    %21 = vector.shape_cast %20 : vector<2xf32> to vector<2x1xf32>
    %22 = arith.addf %19, %21 : vector<2x1xf32>
    %c0_11 = arith.constant 0 : index
    %c0_12 = arith.constant 0 : index
    %23 = vector.load %arg6[%c0_11, %c0_12] : memref<2x1xf32, #tpu.memory_space<vmem>>, vector<2x1xf32>
    tpu.vector_store %arg6[%c0_11, %c0_12], %22 {strides = array<i32>} : memref<2x1xf32, #tpu.memory_space<vmem>>, vector<2x1xf32>,
    %c0_13 = arith.constant 0 : index
    %c0_14 = arith.constant 0 : index
    %24 = vector.load %arg7[%c0_13, %c0_14] : memref<2x32xf32, #tpu.memory_space<vmem>>, vector<2x32xf32>
    %25 = vector.broadcast %14 : vector<2x1xf32> to vector<2x32xf32>
    %26 = arith.mulf %25, %24 : vector<2x32xf32>
    %27 = vector.shape_cast %17 : vector<2x8xf32> to vector<2x8x1xf32>
    %28 = vector.broadcast %27 : vector<2x8x1xf32> to vector<2x8x32xf32>
    %29 = arith.mulf %28, %3 : vector<2x8x32xf32>
    %cst_15 = arith.constant dense<0.000000e+00> : vector<2x32xf32>
    %30 = vector.multi_reduction <add>, %29, %cst_15 [1] : vector<2x8x32xf32> to vector<2x32xf32>
    %31 = arith.addf %26, %30 : vector<2x32xf32>
    %c0_16 = arith.constant 0 : index
    %c0_17 = arith.constant 0 : index
    %32 = vector.load %arg7[%c0_16, %c0_17] : memref<2x32xf32, #tpu.memory_space<vmem>>, vector<2x32xf32>
    tpu.vector_store %arg7[%c0_16, %c0_17], %31 {strides = array<i32>} : memref<2x32xf32, #tpu.memory_space<vmem>>, vector<2x32xf32>,
    %c0_18 = arith.constant 0 : index
    %c0_19 = arith.constant 0 : index
    %33 = vector.load %arg5[%c0_18, %c0_19] : memref<2x1xf32, #tpu.memory_space<vmem>>, vector<2x1xf32>
    tpu.vector_store %arg5[%c0_18, %c0_19], %12 {strides = array<i32>} : memref<2x1xf32, #tpu.memory_space<vmem>>, vector<2x1xf32>,
    %c0_i32_20 = arith.constant 0 : i32
    %34 = arith.cmpi eq, %arg1, %c0_i32_20 : i32
    %35 = arith.extui %34 : i1 to i32
    %c0_i32_21 = arith.constant 0 : i32
    %36 = arith.cmpi ne, %35, %c0_i32_21 : i32
    scf.if %36 {
      %c0_22 = arith.constant 0 : index
      %c0_23 = arith.constant 0 : index
      %37 = vector.load %arg7[%c0_22, %c0_23] : memref<2x32xf32, #tpu.memory_space<vmem>>, vector<2x32xf32>
      %c0_24 = arith.constant 0 : index
      %c0_25 = arith.constant 0 : index
      %38 = vector.load %arg6[%c0_24, %c0_25] : memref<2x1xf32, #tpu.memory_space<vmem>>, vector<2x1xf32>
      %39 = vector.broadcast %38 : vector<2x1xf32> to vector<2x32xf32>
      %40 = arith.divf %37, %39 : vector<2x32xf32>
      %c0_26 = arith.constant 0 : index
      %c0_27 = arith.constant 0 : index
      %41 = vector.load %arg4[%c0_26, %c0_27] : memref<2x32xf32, #tpu.memory_space<vmem>>, vector<2x32xf32>
      tpu.vector_store %arg4[%c0_26, %c0_27], %40 {strides = array<i32>} : memref<2x32xf32, #tpu.memory_space<vmem>>, vector<2x32xf32>,
    } else {
    }
    return
  }
  func.func @transform_0(%arg0: i32, %arg1: i32) -> (i32, i32, i32) {
    %c0_i32 = arith.constant 0 : i32
    %c0_i32_0 = arith.constant 0 : i32
    return %arg0, %arg1, %c0_i32 : i32, i32, i32
  }
  func.func @transform_1(%arg0: i32, %arg1: i32) -> (i32, i32) {
    %c0_i32 = arith.constant 0 : i32
    %c0_i32_0 = arith.constant 0 : i32
    %c0_i32_1 = arith.constant 0 : i32
    return %c0_i32, %c0_i32_0 : i32, i32
  }
  func.func @transform_2(%arg0: i32, %arg1: i32) -> (i32, i32) {
    %c0_i32 = arith.constant 0 : i32
    %c0_i32_0 = arith.constant 0 : i32
    return %arg0, %c0_i32 : i32, i32
  }
}

</mosaic_0001>

<llo_original>
// kernel: tpu_custom_call.1
$region0: #{tpu_custom_call.1}
  #allocation0 [shape = 'u32[]', space=smem, size = 0x4, offset = 0x4, fixed_abs, tag = 'smem constant byte address 0x4 - core index']
  #allocation1 [shape = 'u32[144,128]{1,0:T(1,128)}', space=vmem, size = 0x12000, scoped, tag = 'internal scratch']
  #allocation2 [shape = 'f32[2,1]{1,0:T(2,128)}', space=vmem, size = 0x400, scoped, tag = 'scratch operand']
  #allocation3 [shape = 'f32[2,1]{1,0:T(2,128)}', space=vmem, size = 0x400, scoped, tag = 'scratch operand']
  #allocation4 [shape = 'f32[2,32]{1,0:T(2,128)}', space=vmem, size = 0x400, scoped, tag = 'scratch operand']
  %s0 = inlined_call_operand.hbm [shape: f32[2,8,32], index: 0, kind: input, shape index: {}]
  %s1 = inlined_call_operand.vmem [shape: f32[1,32], index: 1, kind: input, shape index: {}]
  %s2 = inlined_call_operand.hbm [shape: f32[2,32], index: 2, kind: output, shape index: {}]
  %s3 = sld [smem:[#allocation0]]
  $region30: #{tpu_custom_call.1} parent=0
    _
  %s5 = ssub.s32 1, %s3
  %s6 = scalar_select 0, %s5, %s3
  $region1: #{tpu_custom_call.1} parent=0
    #allocation5 [shape = 'u8[8192]{0}', space=vmem, size = 0x2000, scoped, tag = 'input window, operand 0, single buffered']
    #allocation6 [shape = 's32[1]{0}', space=sflag, size = 0x4, scoped, tag = 'scoped memory for tpu_custom_call.1']
    #allocation7 [shape = 's32[1]{0}', space=sflag, size = 0x4, scoped, tag = 'scoped memory for tpu_custom_call.1']
    #allocation8 [shape = 'u8[1024]{0}', space=vmem, size = 0x400, scoped, tag = 'output window, operand 0, single buffered']
    %7 = vsyncpa [#allocation6], 0
    %8 = vsyncpa [#allocation7], 0
    // Predicated region
    $region2: #{tpu_custom_call.1} parent=1 // pred_check
      _
    $region3: #{tpu_custom_call.1} parent=1 // pred_check_branch
      %10 = sbr.rel (0) target = $region5
    $region4: #{tpu_custom_call.1} parent=1 // pred_region
      %s12 = ssub.s32 256, 256
      %13 = vsyncadd [#allocation6], %s12
      %s14 = sshll.u32 [#allocation5], 4
      %s15 = int_to_ptr.vmem [resolvable:$true] %s14
      %20 = dma.hbm_to_vmem [thread:$0]  %s0, 256, %s15, [#allocation6], 128, 128, 8
    $region5: #{tpu_custom_call.1} parent=1 // pred_fallthru
      _
    // Predicated region
    $region6: #{tpu_custom_call.1} parent=1 // pred_check
      _
    $region7: #{tpu_custom_call.1} parent=1 // pred_check_branch
      %22 = sbr.rel (0) target = $region9
    $region8: #{tpu_custom_call.1} parent=1 // pred_region
      _
    $region9: #{tpu_custom_call.1} parent=1 // pred_fallthru
      _
    // Predicated region
    $region10: #{tpu_custom_call.1} parent=1 // pred_check
      _
    $region11: #{tpu_custom_call.1} parent=1 // pred_check_branch
      %24 = sbr.rel (0) target = $region13
    $region12: #{tpu_custom_call.1} parent=1 // pred_region
      %25 = dma.done [#allocation6], 256
    $region13: #{tpu_custom_call.1} parent=1 // pred_fallthru
      _
    %p26 = scmp.eq.s32.totalorder 0, 0
    // Predicated region
    $region14: #{tpu_custom_call.1} parent=1 // pred_check
      %p27 = pneg %p26
    $region15: #{tpu_custom_call.1} parent=1 // pred_check_branch
      %29 = sbr.rel (%p27) target = $region17
    $region16: #{tpu_custom_call.1} parent=1 // pred_region
      %vm30 = vcmask 1024
      %31 = vst.msk [vmem:[#allocation2] sm:$0x3] %vm30, -inf
      %32 = vst.msk [vmem:[#allocation3] sm:$0x3] %vm30, 0.0
      %vm33 = vcmask 254976
      %34 = vst.msk [vmem:[#allocation4] sm:$0x3] %vm33, 0.0
    $region17: #{tpu_custom_call.1} parent=1 // pred_fallthru
      _
    %v35 = vld [vmem:[#allocation5] sm:$0xff]
    %v36 = vld [vmem:[#allocation5 + $0x8] sm:$0xff]
    %v37 = vld [vmem:[%s1] sm:$0x1]
    %v39 = vlaneseq
    %v40 = vshrl.u32 %v39, 7
    %v41 = vsub.s32 0, %v40
    %v42 = vrot.slane %v37, %v41
    %v44 = vmul.f32 %v35, %v42
    %v45 = vmul.f32 %v36, %v42
    %vm46 = vcmask 261120
    %v47 = vsel %vm46, %v44, 0.0
    %48 = vadd.xlane.f32.xlu0 %v47
    %v49 = vpop.xlane.xlu0 %48
    %v50 = vsel %vm46, %v45, 0.0
    %51 = vadd.xlane.f32.xlu0 %v50
    %v52 = vpop.xlane.xlu0 %51
    %v53 = vld [vmem:[#allocation2] sm:$0x3]
    %v56 = vlaneseq
    %v57 = vand.u32 %v56, 127
    %v58 = vlaneseq
    %v59 = vshrl.u32 %v58, 7
    %v60 = vsub.s32 %v57, %v59
    %v61 = vrot.slane %v49, %v60
    %v62 = vlaneseq
    %v63 = vshrl.u32 %v62, 7
    %v64 = vsub.s32 %v57, %v63
    %v65 = vrot.slane %v52, %v64
    %vm66 = vcmask 1041409
    %v67 = vsel %vm66, %v65, %v61
    %vm69 = vcmask 58368
    %v70 = vsel %vm69, %v67, -inf
    %71 = vmax.xlane.f32.xlu0 %v70
    %v72 = vpop.xlane.xlu0 %71
    %v73 = vmax.f32 %v53, %v72
    %v74 = vsub.f32 %v53, %v73
    %v75 = vmul.f32 %v74, 1.442695
    %v76 = vpow.pop %v75
    %78 = vset.pattern.permute.xlu0 0
    %79 = vperm.xlu0 %78, %v73
    %v80 = vpop.permute.xlu0 %79
    %v81 = vlaneseq
    %v82 = vshrl.u32 %v81, 7
    %v83 = vsub.s32 0, %v82
    %v84 = vrot.slane %v80, %v83
    %v85 = vlaneseq
    %v86 = vshrl.u32 %v85, 7
    %v87 = vsub.s32 1, %v86
    %v88 = vrot.slane %v80, %v87
    %v91 = vsub.f32 %v49, %v84
    %v92 = vsub.f32 %v52, %v88
    %v93 = vmul.f32 %v91, 1.442695
    %v94 = vpow.pop %v93
    %v95 = vmul.f32 %v92, 1.442695
    %v96 = vpow.pop %v95
    %v97 = vld [vmem:[#allocation3] sm:$0x3]
    %v98 = vmul.f32 %v76, %v97
    %101 = vset.pattern.permute.xlu0 0
    %102 = vperm.xlu0 %101, %v94
    %v103 = vpop.permute.xlu0 %102
    %104 = vset.pattern.permute.xlu0 0
    %105 = vperm.xlu0 %104, %v96
    %v106 = vpop.permute.xlu0 %105
    %v107 = vlaneseq
    %v108 = vshrl.u32 %v107, 7
    %v109 = vsub.s32 %v57, %v108
    %v110 = vrot.slane %v103, %v109
    %v111 = vlaneseq
    %v112 = vshrl.u32 %v111, 7
    %v113 = vsub.s32 %v57, %v112
    %v114 = vrot.slane %v106, %v113
    %v115 = vsel %vm66, %v114, %v110
    %v117 = vsel %vm69, %v115, 0.0
    %118 = vadd.xlane.f32.xlu0 %v117
    %v119 = vpop.xlane.xlu0 %118
    %v120 = vadd.f32 %v98, %v119
    %vm121 = vcmask 1024
    %122 = vst.msk [vmem:[#allocation3] sm:$0x3] %vm121, %v120
    %v123 = vld [vmem:[#allocation4] sm:$0x3]
    %125 = vset.pattern.permute.xlu0 0
    %126 = vperm.xlu0 %125, %v76
    %v127 = vpop.permute.xlu0 %126
    %v129 = vmul.f32 %v127, %v123
    %v132 = vmul.f32 %v103, %v35
    %v133 = vmul.f32 %v106, %v36
    %v134 = vsel %vm46, %v132, 0.0
    %v135 = vrot.slane %v134, 4
    %v136 = vadd.f32 %v134, %v135
    %v137 = vrot.slane %v136, 2
    %v138 = vadd.f32 %v136, %v137
    %v139 = vrot.slane %v138, 1
    %v140 = vadd.f32 %v138, %v139
    %v141 = vsel %vm46, %v133, 0.0
    %v142 = vrot.slane %v141, 4
    %v143 = vadd.f32 %v141, %v142
    %v144 = vrot.slane %v143, 2
    %v145 = vadd.f32 %v143, %v144
    %v146 = vrot.slane %v145, 1
    %v147 = vadd.f32 %v145, %v146
    %v150 = vsel %vm66, %v147, %v140
    %v152 = vadd.f32 %v129, %v150
    %vm153 = vcmask 254976
    %154 = vst.msk [vmem:[#allocation4] sm:$0x3] %vm153, %v152
    %155 = vst.msk [vmem:[#allocation2] sm:$0x3] %vm121, %v73
    // Predicated region
    $region18: #{tpu_custom_call.1} parent=1 // pred_check
      %p156 = pneg %p26
    $region19: #{tpu_custom_call.1} parent=1 // pred_check_branch
      %158 = sbr.rel (%p156) target = $region21
    $region20: #{tpu_custom_call.1} parent=1 // pred_region
      %v159 = vld [vmem:[#allocation4] sm:$0x3]
      %v160 = vld [vmem:[#allocation3] sm:$0x3]
      %162 = vset.pattern.permute.xlu0 0
      %163 = vperm.xlu0 %162, %v160
      %v164 = vpop.permute.xlu0 %163
      %v166 = vrcp.pop %v164
      %v167 = vmul.f32 %v159, %v166
      %168 = vst.msk [vmem:[#allocation8] sm:$0x3] %vm153, %v167
    $region21: #{tpu_custom_call.1} parent=1 // pred_fallthru
      _
    // Predicated region
    $region22: #{tpu_custom_call.1} parent=1 // pred_check
      _
    $region23: #{tpu_custom_call.1} parent=1 // pred_check_branch
      %170 = sbr.rel (0) target = $region25
    $region24: #{tpu_custom_call.1} parent=1 // pred_region
      %s172 = ssub.s32 32, 32
      %173 = vsyncadd [#allocation7], %s172
      %s175 = sshll.u32 [#allocation8], 4
      %s176 = int_to_ptr.vmem [resolvable:$true] %s175
      %178 = dma.vmem_to_hbm [thread:$0]  %s176, 32, %s2, [#allocation7]
    $region25: #{tpu_custom_call.1} parent=1 // pred_fallthru
      _
    // Predicated region
    $region26: #{tpu_custom_call.1} parent=1 // pred_check
      _
    $region27: #{tpu_custom_call.1} parent=1 // pred_check_branch
      %180 = sbr.rel (0) target = $region29
    $region28: #{tpu_custom_call.1} parent=1 // pred_region
      %181 = dma.done [#allocation7], 32
    $region29: #{tpu_custom_call.1} parent=1 // pred_fallthru
      _
    %182 = vsyncpa [#allocation6], 1
    %183 = vsyncpa [#allocation7], 1

</llo_original>
